<compile_context>
chip_gen: v7x
topology: tpu7x:2x2x1
jax: 0.10.0
libtpu: 0.0.40
codegen_flags: <defaults>
</compile_context>

<pallas_src>
import jax
import jax.numpy as jnp
from jax.experimental import pallas as pl
from jax.experimental.pallas import tpu as pltpu

# ----- "Config" (small synthetic sizes consistent with the module) -----------
GF = 8      # global features
PC = 16     # piece-centric features
SC = 8      # square-centric features
D_IN = GF + PC + SC          # 32
H1A, H1B, H1C = 8, 16, 8
H1 = H1A + H1B + H1C         # 32
H2 = 32
EVAL_OUT = 1


def _critic_kernel(x_ref,
                   w1_ref, b1_ref,
                   w2_ref, b2_ref,
                   w3_ref, b3_ref,
                   out_ref):
    # x tile is (D_IN, tb): batch lives on the 128-wide lane axis.
    x = x_ref[...]
    if not jnp.issubdtype(x.dtype, jnp.floating):
        x = x.astype(jnp.float32)          # the module's x.float(), only for int/bool
    w1 = w1_ref[...]
    if w1.dtype != x.dtype:
        w1 = w1.astype(x.dtype)            # keep the first dot fully bf16 when x is bf16

    # h1^T = relu(W1^T_blockdiag @ x^T + b1): (H1, tb).  MXU N = tb (lane-dense).
    h1 = jnp.maximum(
        jnp.dot(w1, x, preferred_element_type=jnp.float32) + b1_ref[...], 0.0)

    # h2^T = relu(W2^T @ h1^T + b2): (H2, tb)
    h2 = jnp.maximum(
        jnp.dot(w2_ref[...], h1, preferred_element_type=jnp.float32)
        + b2_ref[...], 0.0)

    # Final 1-output layer as VPU multiply + XLU sublane reduction (avoids a
    # 1-wide MXU matmul) -> already the lane-dense (1, tb) output row; tanh runs
    # on full 128-lane vregs.  b3 is a scalar in SMEM.
    val = jnp.tanh(jnp.sum(h2 * w3_ref[...], axis=0, keepdims=True) + b3_ref[0, 0])

    out_ref[...] = val.astype(out_ref.dtype)


def prepare_fused_params(p):
    """Host-side, exact fusion of the three split first-layer Linears into one
    block-diagonal weight, stored in the (out, in) orientation the kernel's
    batch-on-lanes layout wants (y^T = W^T x^T + b as a column)."""
    w1t = jnp.zeros((H1, D_IN), jnp.float32)
    w1t = w1t.at[0:H1A, 0:GF].set(p["w1a"].T)
    w1t = w1t.at[H1A:H1A + H1B, GF:GF + PC].set(p["w1b"].T)
    w1t = w1t.at[H1A + H1B:H1, GF + PC:D_IN].set(p["w1c"].T)
    b1 = jnp.concatenate([p["b1a"], p["b1b"], p["b1c"]], axis=1).reshape(H1, 1)
    return dict(
        w1t=w1t, b1=b1,                       # (H1, D_IN), (H1, 1)
        w2t=p["w2"].T, b2=p["b2"].reshape(H2, 1),   # (H2, H1), (H2, 1)
        w3=p["w3"].reshape(H2, 1),            # (H2, 1) column for the reduction
        b3=p["b3"].reshape(1, 1),             # (1, 1) scalar -> SMEM
    )


def critic_giraffe_forward(x, fused, *, tb=16384):
    """x: (B, D_IN) float (f32/bf16) or int; fused: dict from prepare_fused_params.
    Returns (B, 1) float32."""
    B = x.shape[0]
    assert x.shape[1] == D_IN
    if tb >= B:
        tb = B                                # single tile: block == full array, any B ok
    else:
        tb = max(128, (tb // 128) * 128)      # true tiles must be lane-aligned
    grid = (pl.cdiv(B, tb),)

    # Layout plumbing only: batch onto the lane axis.  (Producer code could emit
    # x already as (D_IN, B) to skip this pass entirely.)
    x_t = x.T                                 # (D_IN, B)

    const = lambda i: (0, 0)                  # weights/biases: VMEM-resident every step
    in_specs = [
        pl.BlockSpec((D_IN, tb), lambda i: (0, i)),          # x^T, tiled over batch
        pl.BlockSpec((H1, D_IN), const),                     # W1^T (block-diagonal, fused)
        pl.BlockSpec((H1, 1), const),                        # b1 column
        pl.BlockSpec((H2, H1), const),                       # W2^T
        pl.BlockSpec((H2, 1), const),                        # b2 column
        pl.BlockSpec((H2, 1), const),                        # W3 column
        pl.BlockSpec(memory_space=pltpu.MemorySpace.SMEM),   # b3 scalar in SMEM
    ]
    out_specs = pl.BlockSpec((1, tb), lambda i: (0, i))      # lane-dense output row

    itemsize = jnp.dtype(x.dtype).itemsize
    cost = pl.CostEstimate(
        flops=2 * B * (D_IN * H1 + H1 * H2 + H2),
        transcendentals=B,
        bytes_accessed=B * (D_IN * itemsize + 4)
        + 4 * (H1 * D_IN + H2 * H1 + H1 + H2 + H2 + 1),
    )

    out_row = pl.pallas_call(
        _critic_kernel,
        out_shape=jax.ShapeDtypeStruct((1, B), jnp.float32),
        grid=grid,
        in_specs=in_specs,
        out_specs=out_specs,
        compiler_params=pltpu.CompilerParams(
            # "parallel" shards the batch axis across TensorCores where supported
            # (v7x megacore); harmless single-core no-op on v5e/v6e.
            dimension_semantics=("parallel",),
            vmem_limit_bytes=32 * 1024 * 1024,
        ),
        cost_estimate=cost,
    )(x_t, fused["w1t"], fused["b1"], fused["w2t"], fused["b2"],
      fused["w3"], fused["b3"])

    return out_row.reshape(B, EVAL_OUT)


def init_params(key):
    """Deterministic init matching PyTorch nn.Linear shapes (stored as (in, out))."""
    def linear(key, fan_in, fan_out):
        kw, kb = jax.random.split(key)
        bound = 1.0 / jnp.sqrt(float(fan_in))
        w = jax.random.uniform(kw, (fan_in, fan_out), jnp.float32, -bound, bound)
        b = jax.random.uniform(kb, (1, fan_out), jnp.float32, -bound, bound)
        return w, b

    keys = jax.random.split(key, 5)
    w1a, b1a = linear(keys[0], GF, H1A)
    w1b, b1b = linear(keys[1], PC, H1B)
    w1c, b1c = linear(keys[2], SC, H1C)
    w2, b2 = linear(keys[3], H1, H2)
    w3, b3 = linear(keys[4], H2, EVAL_OUT)
    return dict(w1a=w1a, b1a=b1a, w1b=w1b, b1b=b1b, w1c=w1c, b1c=b1c,
                w2=w2, b2=b2, w3=w3, b3=b3)


def _reference(x, p):
    """Pure-JAX reference with the ORIGINAL (unfused, untransposed) split layers."""
    x = x.astype(jnp.float32)
    x1, x2, x3 = x[:, :GF], x[:, GF:GF + PC], x[:, GF + PC:GF + PC + SC]
    h1 = jnp.concatenate([
        jax.nn.relu(x1 @ p["w1a"] + p["b1a"]),
        jax.nn.relu(x2 @ p["w1b"] + p["b1b"]),
        jax.nn.relu(x3 @ p["w1c"] + p["b1c"]),
    ], axis=1)
    h2 = jax.nn.relu(h1 @ p["w2"] + p["b2"])
    return jnp.tanh(h2 @ p["w3"] + p["b3"])


if __name__ == "__main__":
    key = jax.random.PRNGKey(0)
    kp, kx1, kx2 = jax.random.split(key, 3)

    params = init_params(kp)
    fused = prepare_fused_params(params)

    # --- 1) Small required test: batch=2 (single grid step, block == full array).
    batch = 2
    x = jax.random.normal(kx1, (batch, D_IN), dtype=jnp.float32)
    out = jax.block_until_ready(critic_giraffe_forward(x, fused))
    ref = _reference(x, params)
    assert out.shape == (batch, EVAL_OUT)
    assert jnp.allclose(out, ref, atol=1e-4, rtol=1e-4), \
        float(jnp.abs(out - ref).max())

    # --- 2) Multi-step pipelined grid incl. a ragged final batch tile
    #        (B=300, tb=128 -> 3 grid steps, last tile has 44 valid columns).
    batch2 = 300
    x2 = jax.random.normal(kx2, (batch2, D_IN), dtype=jnp.float32)
    out2 = jax.block_until_ready(critic_giraffe_forward(x2, fused, tb=128))
    ref2 = _reference(x2, params)
    assert out2.shape == (batch2, EVAL_OUT)
    assert jnp.allclose(out2, ref2, atol=1e-4, rtol=1e-4), \
        float(jnp.abs(out2 - ref2).max())

    # --- 3) bf16-x fast path (halves HBM read bytes of x); loose tolerance vs
    #        the f32 reference since the first matmul runs in bf16.
    x3 = x2.astype(jnp.bfloat16)
    out3 = jax.block_until_ready(critic_giraffe_forward(x3, fused, tb=128))
    assert out3.shape == (batch2, EVAL_OUT)
    assert jnp.allclose(out3, ref2, atol=1e-1, rtol=1e-1), \
        float(jnp.abs(out3 - ref2).max())

    print("KERNEL_OK")
</pallas_src>

<mosaic_0001>
module attributes {stable_mosaic.version = 11 : i64} {
  func.func @_critic_kernel(%arg0: i32, %arg1: memref<32x2xf32, #tpu.memory_space<vmem>>, %arg2: memref<32x32xf32, #tpu.memory_space<vmem>>, %arg3: memref<32x1xf32, #tpu.memory_space<vmem>>, %arg4: memref<32x32xf32, #tpu.memory_space<vmem>>, %arg5: memref<32x1xf32, #tpu.memory_space<vmem>>, %arg6: memref<32x1xf32, #tpu.memory_space<vmem>>, %arg7: memref<1x1xf32, #tpu.memory_space<smem>>, %arg8: memref<1x2xf32, #tpu.memory_space<vmem>>) attributes {dimension_semantics = [#tpu.dimension_semantics<parallel>], iteration_bounds = array<i64: 1>, scalar_prefetch = 0 : i64, scratch_operands = 0 : i64, tpu.core_type = #tpu.core_type<tc>, window_params = [{transform_indices = @transform_0, window_bounds = array<i64: 32, 2>}, {pipeline_mode = #tpu.pipeline_mode<synchronous>, transform_indices = @transform_1, window_bounds = array<i64: 32, 32>}, {pipeline_mode = #tpu.pipeline_mode<synchronous>, transform_indices = @transform_2, window_bounds = array<i64: 32, 1>}, {pipeline_mode = #tpu.pipeline_mode<synchronous>, transform_indices = @transform_3, window_bounds = array<i64: 32, 32>}, {pipeline_mode = #tpu.pipeline_mode<synchronous>, transform_indices = @transform_4, window_bounds = array<i64: 32, 1>}, {pipeline_mode = #tpu.pipeline_mode<synchronous>, transform_indices = @transform_5, window_bounds = array<i64: 32, 1>}, {transform_indices = @transform_6, window_bounds = array<i64: 1, 1>}, {transform_indices = @transform_7, window_bounds = array<i64: 1, 2>}]} {
    %c0 = arith.constant 0 : index
    %c0_0 = arith.constant 0 : index
    %0 = vector.load %arg1[%c0, %c0_0] : memref<32x2xf32, #tpu.memory_space<vmem>>, vector<32x2xf32>
    %c0_1 = arith.constant 0 : index
    %c0_2 = arith.constant 0 : index
    %1 = vector.load %arg2[%c0_1, %c0_2] : memref<32x32xf32, #tpu.memory_space<vmem>>, vector<32x32xf32>
    %cst = arith.constant dense<0.000000e+00> : vector<32x2xf32>
    %2 = tpu.matmul %1, %0, %cst {dimension_numbers = #tpu.dot_dimension_numbers<[1], [0], [0], [1], [0, 0, 1, 1], [], []>} : vector<32x32xf32>, vector<32x2xf32>, vector<32x2xf32> -> vector<32x2xf32>
    %c0_3 = arith.constant 0 : index
    %c0_4 = arith.constant 0 : index
    %3 = vector.load %arg3[%c0_3, %c0_4] : memref<32x1xf32, #tpu.memory_space<vmem>>, vector<32x1xf32>
    %4 = vector.broadcast %3 : vector<32x1xf32> to vector<32x2xf32>
    %5 = arith.addf %2, %4 : vector<32x2xf32>
    %cst_5 = arith.constant 0.000000e+00 : f32
    %6 = vector.broadcast %cst_5 : f32 to vector<32x2xf32>
    %7 = arith.maximumf %5, %6 : vector<32x2xf32>
    %c0_6 = arith.constant 0 : index
    %c0_7 = arith.constant 0 : index
    %8 = vector.load %arg4[%c0_6, %c0_7] : memref<32x32xf32, #tpu.memory_space<vmem>>, vector<32x32xf32>
    %cst_8 = arith.constant dense<0.000000e+00> : vector<32x2xf32>
    %9 = tpu.matmul %8, %7, %cst_8 {dimension_numbers = #tpu.dot_dimension_numbers<[1], [0], [0], [1], [0, 0, 1, 1], [], []>} : vector<32x32xf32>, vector<32x2xf32>, vector<32x2xf32> -> vector<32x2xf32>
    %c0_9 = arith.constant 0 : index
    %c0_10 = arith.constant 0 : index
    %10 = vector.load %arg5[%c0_9, %c0_10] : memref<32x1xf32, #tpu.memory_space<vmem>>, vector<32x1xf32>
    %11 = vector.broadcast %10 : vector<32x1xf32> to vector<32x2xf32>
    %12 = arith.addf %9, %11 : vector<32x2xf32>
    %cst_11 = arith.constant 0.000000e+00 : f32
    %13 = vector.broadcast %cst_11 : f32 to vector<32x2xf32>
    %14 = arith.maximumf %12, %13 : vector<32x2xf32>
    %c0_12 = arith.constant 0 : index
    %c0_13 = arith.constant 0 : index
    %15 = vector.load %arg6[%c0_12, %c0_13] : memref<32x1xf32, #tpu.memory_space<vmem>>, vector<32x1xf32>
    %16 = vector.broadcast %15 : vector<32x1xf32> to vector<32x2xf32>
    %17 = arith.mulf %14, %16 : vector<32x2xf32>
    %cst_14 = arith.constant dense<0.000000e+00> : vector<2xf32>
    %18 = vector.multi_reduction <add>, %17, %cst_14 [0] : vector<32x2xf32> to vector<2xf32>
    %19 = vector.shape_cast %18 : vector<2xf32> to vector<1x2xf32>
    %c0_15 = arith.constant 0 : index
    %c0_16 = arith.constant 0 : index
    %20 = memref.load %arg7[%c0_15, %c0_16] : memref<1x1xf32, #tpu.memory_space<smem>>
    %21 = vector.broadcast %20 : f32 to vector<1x2xf32>
    %22 = arith.addf %19, %21 : vector<1x2xf32>
    %23 = math.tanh %22 : vector<1x2xf32>
    %c0_17 = arith.constant 0 : index
    %c0_18 = arith.constant 0 : index
    %24 = vector.load %arg8[%c0_17, %c0_18] : memref<1x2xf32, #tpu.memory_space<vmem>>, vector<1x2xf32>
    tpu.vector_store %arg8[%c0_17, %c0_18], %23 {strides = array<i32>} : memref<1x2xf32, #tpu.memory_space<vmem>>, vector<1x2xf32>,
    return
  }
  func.func @transform_0(%arg0: i32) -> (i32, i32) {
    %c0_i32 = arith.constant 0 : i32
    %c0_i32_0 = arith.constant 0 : i32
    return %c0_i32, %arg0 : i32, i32
  }
  func.func @transform_1(%arg0: i32) -> (i32, i32) {
    %c0_i32 = arith.constant 0 : i32
    %c0_i32_0 = arith.constant 0 : i32
    %c0_i32_1 = arith.constant 0 : i32
    return %c0_i32, %c0_i32_0 : i32, i32
  }
  func.func @transform_2(%arg0: i32) -> (i32, i32) {
    %c0_i32 = arith.constant 0 : i32
    %c0_i32_0 = arith.constant 0 : i32
    %c0_i32_1 = arith.constant 0 : i32
    return %c0_i32, %c0_i32_0 : i32, i32
  }
  func.func @transform_3(%arg0: i32) -> (i32, i32) {
    %c0_i32 = arith.constant 0 : i32
    %c0_i32_0 = arith.constant 0 : i32
    %c0_i32_1 = arith.constant 0 : i32
    return %c0_i32, %c0_i32_0 : i32, i32
  }
  func.func @transform_4(%arg0: i32) -> (i32, i32) {
    %c0_i32 = arith.constant 0 : i32
    %c0_i32_0 = arith.constant 0 : i32
    %c0_i32_1 = arith.constant 0 : i32
    return %c0_i32, %c0_i32_0 : i32, i32
  }
  func.func @transform_5(%arg0: i32) -> (i32, i32) {
    %c0_i32 = arith.constant 0 : i32
    %c0_i32_0 = arith.constant 0 : i32
    %c0_i32_1 = arith.constant 0 : i32
    return %c0_i32, %c0_i32_0 : i32, i32
  }
  func.func @transform_6(%arg0: i32) -> (i32, i32) {
    %c0_i32 = arith.constant 0 : i32
    %c0_i32_0 = arith.constant 0 : i32
    %c0_i32_1 = arith.constant 0 : i32
    return %c0_i32, %c0_i32_0 : i32, i32
  }
  func.func @transform_7(%arg0: i32) -> (i32, i32) {
    %c0_i32 = arith.constant 0 : i32
    %c0_i32_0 = arith.constant 0 : i32
    return %c0_i32, %arg0 : i32, i32
  }
}

</mosaic_0001>

<llo_original>
// kernel: tpu_custom_call.1
$region0: #{tpu_custom_call.1}
  #allocation0 [shape = 'u32[]', space=smem, size = 0x4, offset = 0x4, fixed_abs, tag = 'smem constant byte address 0x4 - core index']
  #allocation1 [shape = 'u32[144,128]{1,0:T(1,128)}', space=vmem, size = 0x12000, scoped, tag = 'internal scratch']
  #allocation2 [shape = 'f32[1,1]{1,0:T(1,128)S(6)}', space=smem, size = 0x200, scoped, tag = 'scoped memory for tpu_custom_call.1']
  %s0 = inlined_call_operand.vmem [shape: f32[32,2], index: 0, kind: input, shape index: {}]
  %s1 = inlined_call_operand.vmem [shape: f32[32,32], index: 1, kind: input, shape index: {}]
  %s2 = inlined_call_operand.vmem [shape: f32[32,1], index: 2, kind: input, shape index: {}]
  %s3 = inlined_call_operand.vmem [shape: f32[32,32], index: 3, kind: input, shape index: {}]
  %s4 = inlined_call_operand.vmem [shape: f32[32,1], index: 4, kind: input, shape index: {}]
  %s5 = inlined_call_operand.vmem [shape: f32[32,1], index: 5, kind: input, shape index: {}]
  %s6 = inlined_call_operand.<no memory space> [shape: f32[1,1], index: 6, kind: input, shape index: {}]
  %s7 = inlined_call_operand.hbm [shape: f32[1,2], index: 7, kind: output, shape index: {}]
  %s8 = sld [smem:[#allocation0]]
  $region38: #{tpu_custom_call.1} parent=0
    _
  %s10 = ssub.s32 1, %s8
  %s11 = scalar_select 0, %s10, %s8
  %12 = sst [smem:[#allocation2]] %s6
  $region1: #{tpu_custom_call.1} parent=0
    #allocation3 [shape = 'u8[512]{0}', space=vmem, size = 0x400, scoped, tag = 'output window, operand 0, single buffered']
    #allocation4 [shape = 's32[1]{0}', space=sflag, size = 0x4, scoped, tag = 'scoped memory for tpu_custom_call.1']
    %13 = vsyncpa [#allocation4], 0
    // Predicated region
    $region2: #{tpu_custom_call.1} parent=1 // pred_check
      _
    $region3: #{tpu_custom_call.1} parent=1 // pred_check_branch
      %15 = sbr.rel (0) target = $region5
    $region4: #{tpu_custom_call.1} parent=1 // pred_region
      _
    $region5: #{tpu_custom_call.1} parent=1 // pred_fallthru
      _
    // Predicated region
    $region6: #{tpu_custom_call.1} parent=1 // pred_check
      _
    $region7: #{tpu_custom_call.1} parent=1 // pred_check_branch
      %17 = sbr.rel (0) target = $region9
    $region8: #{tpu_custom_call.1} parent=1 // pred_region
      _
    $region9: #{tpu_custom_call.1} parent=1 // pred_fallthru
      _
    // Predicated region
    $region10: #{tpu_custom_call.1} parent=1 // pred_check
      _
    $region11: #{tpu_custom_call.1} parent=1 // pred_check_branch
      %19 = sbr.rel (0) target = $region13
    $region12: #{tpu_custom_call.1} parent=1 // pred_region
      _
    $region13: #{tpu_custom_call.1} parent=1 // pred_fallthru
      _
    // Predicated region
    $region14: #{tpu_custom_call.1} parent=1 // pred_check
      _
    $region15: #{tpu_custom_call.1} parent=1 // pred_check_branch
      %21 = sbr.rel (0) target = $region17
    $region16: #{tpu_custom_call.1} parent=1 // pred_region
      _
    $region17: #{tpu_custom_call.1} parent=1 // pred_fallthru
      _
    // Predicated region
    $region18: #{tpu_custom_call.1} parent=1 // pred_check
      _
    $region19: #{tpu_custom_call.1} parent=1 // pred_check_branch
      %23 = sbr.rel (0) target = $region21
    $region20: #{tpu_custom_call.1} parent=1 // pred_region
      _
    $region21: #{tpu_custom_call.1} parent=1 // pred_fallthru
      _
    // Predicated region
    $region22: #{tpu_custom_call.1} parent=1 // pred_check
      _
    $region23: #{tpu_custom_call.1} parent=1 // pred_check_branch
      %25 = sbr.rel (0) target = $region25
    $region24: #{tpu_custom_call.1} parent=1 // pred_region
      _
    $region25: #{tpu_custom_call.1} parent=1 // pred_fallthru
      _
    // Predicated region
    $region26: #{tpu_custom_call.1} parent=1 // pred_check
      _
    $region27: #{tpu_custom_call.1} parent=1 // pred_check_branch
      %27 = sbr.rel (0) target = $region29
    $region28: #{tpu_custom_call.1} parent=1 // pred_region
      _
    $region29: #{tpu_custom_call.1} parent=1 // pred_fallthru
      _
    %v28 = vld [vmem:[%s0] sm:$0xff]
    %v29 = vld [vmem:[%s0 + $0x8] sm:$0xff]
    %v30 = vld [vmem:[%s0 + $0x10] sm:$0xff]
    %v31 = vld [vmem:[%s0 + $0x18] sm:$0xff]
    %v32 = vld [vmem:[%s1] sm:$0xff]
    %v33 = vld [vmem:[%s1 + $0x8] sm:$0xff]
    %v34 = vld [vmem:[%s1 + $0x10] sm:$0xff]
    %v35 = vld [vmem:[%s1 + $0x18] sm:$0xff]
    %v36 = vld [vmem:[%s2] sm:$0xff]
    %v37 = vld [vmem:[%s2 + $0x8] sm:$0xff]
    %v38 = vld [vmem:[%s2 + $0x10] sm:$0xff]
    %v39 = vld [vmem:[%s2 + $0x18] sm:$0xff]
    %41 = vset.pattern.permute.xlu0 0
    %42 = vperm.xlu0 %41, %v36
    %v43 = vpop.permute.xlu0 %42
    %46 = vset.pattern.permute.xlu0 0
    %47 = vperm.xlu0 %46, %v37
    %v48 = vpop.permute.xlu0 %47
    %51 = vset.pattern.permute.xlu0 0
    %52 = vperm.xlu0 %51, %v38
    %v53 = vpop.permute.xlu0 %52
    %56 = vset.pattern.permute.xlu0 0
    %57 = vperm.xlu0 %56, %v39
    %v58 = vpop.permute.xlu0 %57
    %vm60 = vcmask 261120
    %v62 = vsel %vm60, %v32, 0
    %v65 = vsel %vm60, %v33, 0
    %v68 = vsel %vm60, %v34, 0
    %v71 = vsel %vm60, %v35, 0
    %73 = vmatprep.subr.mxu0 0.0
    %74 = vmatpush1.msra.mxu0 %v28
    %75 = vmatprep.subr.mxu0 0.0
    %76 = vmatpush1.msra.mxu0 %v29
    %77 = vmatprep.subr.mxu0 0.0
    %78 = vmatpush1.msra.mxu0 %v30
    %79 = vmatprep.subr.mxu0 0.0
    %80 = vmatpush1.msra.mxu0 %v31
    %81 = vmatprep.subr.mxu0 0.0
    %82 = vmatpush1.msra.mxu0 0.0
    %83 = vmatprep.subr.mxu0 0.0
    %84 = vmatpush1.msra.mxu0 0.0
    %85 = vmatprep.subr.mxu0 0.0
    %86 = vmatpush1.msra.mxu0 0.0
    %87 = vmatprep.subr.mxu0 0.0
    %88 = vmatpush1.msra.mxu0 0.0
    %89 = vmatprep.subr.mxu0 0.0
    %90 = vmatpush1.msra.mxu0 0.0
    %91 = vmatprep.subr.mxu0 0.0
    %92 = vmatpush1.msra.mxu0 0.0
    %93 = vmatprep.subr.mxu0 0.0
    %94 = vmatpush1.msra.mxu0 0.0
    %95 = vmatprep.subr.mxu0 0.0
    %96 = vmatpush1.msra.mxu0 0.0
    %97 = vmatprep.subr.mxu0 0.0
    %98 = vmatpush1.msra.mxu0 0.0
    %99 = vmatprep.subr.mxu0 0.0
    %100 = vmatpush1.msra.mxu0 0.0
    %101 = vmatprep.subr.mxu0 0.0
    %102 = vmatpush1.msra.mxu0 0.0
    %103 = vmatprep.subr.mxu0 0.0
    %104 = vmatpush1.msra.mxu0 0.0
    %105 = vmatprep.subr.mxu0 0.0
    %106 = vmatpush1.msra.mxu0 0.0
    %107 = vmatprep.subr.mxu0 0.0
    %108 = vmatpush1.msra.mxu0 0.0
    %109 = vmatprep.subr.mxu0 0.0
    %110 = vmatpush1.msra.mxu0 0.0
    %111 = vmatprep.subr.mxu0 0.0
    %112 = vmatpush1.msra.mxu0 0.0
    %113 = vmatprep.subr.mxu0 0.0
    %114 = vmatpush1.msra.mxu0 0.0
    %115 = vmatprep.subr.mxu0 0.0
    %116 = vmatpush1.msra.mxu0 0.0
    %117 = vmatprep.subr.mxu0 0.0
    %118 = vmatpush1.msra.mxu0 0.0
    %119 = vmatprep.subr.mxu0 0.0
    %120 = vmatpush1.msra.mxu0 0.0
    %121 = vmatprep.subr.mxu0 0.0
    %122 = vmatpush1.msra.mxu0 0.0
    %123 = vmatprep.subr.mxu0 0.0
    %124 = vmatpush1.msra.mxu0 0.0
    %125 = vmatprep.subr.mxu0 0.0
    %126 = vmatpush1.msra.mxu0 0.0
    %127 = vmatprep.subr.mxu0 0.0
    %128 = vmatpush1.msra.mxu0 0.0
    %129 = vmatprep.subr.mxu0 0.0
    %130 = vmatpush1.msra.mxu0 0.0
    %131 = vmatprep.subr.mxu0 0.0
    %132 = vmatpush1.msra.mxu0 0.0
    %133 = vmatprep.subr.mxu0 0.0
    %134 = vmatpush1.msra.mxu0 0.0
    %135 = vmatprep.subr.mxu0 0.0
    %136 = vmatpush1.msra.mxu0 0.0
    %137 = vmatprep.mubr.f32.mxu0 0.0
    %138 = vmatmul.mubr.f32.gmra.mrb[0].mxu0 %v62
    %v139 = vpop.f32.mrb[0].mxu0
    %v140 = vadd.f32 %v43, %v139
    %v141 = vpop.f32.mrb[0].mxu0
    %142 = vmatprep.mubr.f32.mxu0 0.0
    %143 = vmatmul.mubr.f32.gmra.mrb[0].mxu0 %v65
    %v144 = vpop.f32.mrb[0].mxu0
    %v145 = vadd.f32 %v48, %v144
    %v146 = vpop.f32.mrb[0].mxu0
    %147 = vmatprep.mubr.f32.mxu0 0.0
    %148 = vmatmul.mubr.f32.gmra.mrb[0].mxu0 %v68
    %v149 = vpop.f32.mrb[0].mxu0
    %v150 = vadd.f32 %v53, %v149
    %v151 = vpop.f32.mrb[0].mxu0
    %152 = vmatprep.mubr.f32.mxu0 0.0
    %153 = vmatmul.mubr.f32.gmra.mrb[0].mxu0 %v71
    %v154 = vpop.f32.mrb[0].mxu0
    %v155 = vadd.f32 %v58, %v154
    %v156 = vpop.f32.mrb[0].mxu0
    %157 = vdwg.mxu0
    %v158 = vmax.f32 %v140, 0.0
    %v159 = vmax.f32 %v145, 0.0
    %v160 = vmax.f32 %v150, 0.0
    %v161 = vmax.f32 %v155, 0.0
    %v162 = vld [vmem:[%s3] sm:$0xff]
    %v163 = vld [vmem:[%s3 + $0x8] sm:$0xff]
    %v164 = vld [vmem:[%s3 + $0x10] sm:$0xff]
    %v165 = vld [vmem:[%s3 + $0x18] sm:$0xff]
    %v166 = vld [vmem:[%s4] sm:$0xff]
    %v167 = vld [vmem:[%s4 + $0x8] sm:$0xff]
    %v168 = vld [vmem:[%s4 + $0x10] sm:$0xff]
    %v169 = vld [vmem:[%s4 + $0x18] sm:$0xff]
    %171 = vset.pattern.permute.xlu0 0
    %172 = vperm.xlu0 %171, %v166
    %v173 = vpop.permute.xlu0 %172
    %176 = vset.pattern.permute.xlu0 0
    %177 = vperm.xlu0 %176, %v167
    %v178 = vpop.permute.xlu0 %177
    %181 = vset.pattern.permute.xlu0 0
    %182 = vperm.xlu0 %181, %v168
    %v183 = vpop.permute.xlu0 %182
    %186 = vset.pattern.permute.xlu0 0
    %187 = vperm.xlu0 %186, %v169
    %v188 = vpop.permute.xlu0 %187
    %v191 = vsel %vm60, %v162, 0
    %v194 = vsel %vm60, %v163, 0
    %v197 = vsel %vm60, %v164, 0
    %v200 = vsel %vm60, %v165, 0
    %202 = vmatprep.subr.mxu0 0.0
    %203 = vmatpush1.msra.mxu0 %v158
    %204 = vmatprep.subr.mxu0 0.0
    %205 = vmatpush1.msra.mxu0 %v159
    %206 = vmatprep.subr.mxu0 0.0
    %207 = vmatpush1.msra.mxu0 %v160
    %208 = vmatprep.subr.mxu0 0.0
    %209 = vmatpush1.msra.mxu0 %v161
    %210 = vmatprep.subr.mxu0 0.0
    %211 = vmatpush1.msra.mxu0 0.0
    %212 = vmatprep.subr.mxu0 0.0
    %213 = vmatpush1.msra.mxu0 0.0
    %214 = vmatprep.subr.mxu0 0.0
    %215 = vmatpush1.msra.mxu0 0.0
    %216 = vmatprep.subr.mxu0 0.0
    %217 = vmatpush1.msra.mxu0 0.0
    %218 = vmatprep.subr.mxu0 0.0
    %219 = vmatpush1.msra.mxu0 0.0
    %220 = vmatprep.subr.mxu0 0.0
    %221 = vmatpush1.msra.mxu0 0.0
    %222 = vmatprep.subr.mxu0 0.0
    %223 = vmatpush1.msra.mxu0 0.0
    %224 = vmatprep.subr.mxu0 0.0
    %225 = vmatpush1.msra.mxu0 0.0
    %226 = vmatprep.subr.mxu0 0.0
    %227 = vmatpush1.msra.mxu0 0.0
    %228 = vmatprep.subr.mxu0 0.0
    %229 = vmatpush1.msra.mxu0 0.0
    %230 = vmatprep.subr.mxu0 0.0
    %231 = vmatpush1.msra.mxu0 0.0
    %232 = vmatprep.subr.mxu0 0.0
    %233 = vmatpush1.msra.mxu0 0.0
    %234 = vmatprep.subr.mxu0 0.0
    %235 = vmatpush1.msra.mxu0 0.0
    %236 = vmatprep.subr.mxu0 0.0
    %237 = vmatpush1.msra.mxu0 0.0
    %238 = vmatprep.subr.mxu0 0.0
    %239 = vmatpush1.msra.mxu0 0.0
    %240 = vmatprep.subr.mxu0 0.0
    %241 = vmatpush1.msra.mxu0 0.0
    %242 = vmatprep.subr.mxu0 0.0
    %243 = vmatpush1.msra.mxu0 0.0
    %244 = vmatprep.subr.mxu0 0.0
    %245 = vmatpush1.msra.mxu0 0.0
    %246 = vmatprep.subr.mxu0 0.0
    %247 = vmatpush1.msra.mxu0 0.0
    %248 = vmatprep.subr.mxu0 0.0
    %249 = vmatpush1.msra.mxu0 0.0
    %250 = vmatprep.subr.mxu0 0.0
    %251 = vmatpush1.msra.mxu0 0.0
    %252 = vmatprep.subr.mxu0 0.0
    %253 = vmatpush1.msra.mxu0 0.0
    %254 = vmatprep.subr.mxu0 0.0
    %255 = vmatpush1.msra.mxu0 0.0
    %256 = vmatprep.subr.mxu0 0.0
    %257 = vmatpush1.msra.mxu0 0.0
    %258 = vmatprep.subr.mxu0 0.0
    %259 = vmatpush1.msra.mxu0 0.0
    %260 = vmatprep.subr.mxu0 0.0
    %261 = vmatpush1.msra.mxu0 0.0
    %262 = vmatprep.subr.mxu0 0.0
    %263 = vmatpush1.msra.mxu0 0.0
    %264 = vmatprep.subr.mxu0 0.0
    %265 = vmatpush1.msra.mxu0 0.0
    %266 = vmatprep.mubr.f32.mxu0 0.0
    %267 = vmatmul.mubr.f32.gmra.mrb[0].mxu0 %v191
    %v268 = vpop.f32.mrb[0].mxu0
    %v269 = vadd.f32 %v173, %v268
    %v270 = vpop.f32.mrb[0].mxu0
    %271 = vmatprep.mubr.f32.mxu0 0.0
    %272 = vmatmul.mubr.f32.gmra.mrb[0].mxu0 %v194
    %v273 = vpop.f32.mrb[0].mxu0
    %v274 = vadd.f32 %v178, %v273
    %v275 = vpop.f32.mrb[0].mxu0
    %276 = vmatprep.mubr.f32.mxu0 0.0
    %277 = vmatmul.mubr.f32.gmra.mrb[0].mxu0 %v197
    %v278 = vpop.f32.mrb[0].mxu0
    %v279 = vadd.f32 %v183, %v278
    %v280 = vpop.f32.mrb[0].mxu0
    %281 = vmatprep.mubr.f32.mxu0 0.0
    %282 = vmatmul.mubr.f32.gmra.mrb[0].mxu0 %v200
    %v283 = vpop.f32.mrb[0].mxu0
    %v284 = vadd.f32 %v188, %v283
    %v285 = vpop.f32.mrb[0].mxu0
    %286 = vdwg.mxu0
    %v287 = vmax.f32 %v269, 0.0
    %v288 = vmax.f32 %v274, 0.0
    %v289 = vmax.f32 %v279, 0.0
    %v290 = vmax.f32 %v284, 0.0
    %v291 = vld [vmem:[%s5] sm:$0xff]
    %v292 = vld [vmem:[%s5 + $0x8] sm:$0xff]
    %v293 = vld [vmem:[%s5 + $0x10] sm:$0xff]
    %v294 = vld [vmem:[%s5 + $0x18] sm:$0xff]
    %296 = vset.pattern.permute.xlu0 0
    %297 = vperm.xlu0 %296, %v291
    %v298 = vpop.permute.xlu0 %297
    %301 = vset.pattern.permute.xlu0 0
    %302 = vperm.xlu0 %301, %v292
    %v303 = vpop.permute.xlu0 %302
    %306 = vset.pattern.permute.xlu0 0
    %307 = vperm.xlu0 %306, %v293
    %v308 = vpop.permute.xlu0 %307
    %311 = vset.pattern.permute.xlu0 0
    %312 = vperm.xlu0 %311, %v294
    %v313 = vpop.permute.xlu0 %312
    %v315 = vmul.f32 %v287, %v298
    %v316 = vmul.f32 %v288, %v303
    %v317 = vmul.f32 %v289, %v308
    %v318 = vmul.f32 %v290, %v313
    %vm319 = vcmask 15360
    %v320 = vsel %vm319, %v315, 0.0
    %v321 = vsel %vm319, %v316, 0.0
    %v322 = vadd.f32 %v320, %v321
    %v323 = vsel %vm319, %v317, 0.0
    %v324 = vadd.f32 %v322, %v323
    %v325 = vsel %vm319, %v318, 0.0
    %v326 = vadd.f32 %v324, %v325
    %v327 = vrot.slane %v326, 4
    %v328 = vadd.f32 %v326, %v327
    %v329 = vrot.slane %v328, 2
    %v330 = vadd.f32 %v328, %v329
    %v331 = vrot.slane %v330, 1
    %v332 = vadd.f32 %v330, %v331
    %s333 = sld [smem:[#allocation2]]
    %v334 = vstv %s333
    %v335 = vadd.f32 %v332, %v334
    %v336 = vtanh.pop %v335
    %vm337 = vcmask 8192
    %338 = vst.msk [vmem:[#allocation3] sm:$0x1] %vm337, %v336
    // Predicated region
    $region30: #{tpu_custom_call.1} parent=1 // pred_check
      _
    $region31: #{tpu_custom_call.1} parent=1 // pred_check_branch
      %340 = sbr.rel (0) target = $region33
    $region32: #{tpu_custom_call.1} parent=1 // pred_region
      %s342 = ssub.s32 16, 16
      %343 = vsyncadd [#allocation4], %s342
      %s345 = sshll.u32 [#allocation3], 4
      %s346 = int_to_ptr.vmem [resolvable:$true] %s345
      %348 = dma.vmem_to_hbm [thread:$0]  %s346, 16, %s7, [#allocation4]
    $region33: #{tpu_custom_call.1} parent=1 // pred_fallthru
      _
    // Predicated region
    $region34: #{tpu_custom_call.1} parent=1 // pred_check
      _
    $region35: #{tpu_custom_call.1} parent=1 // pred_check_branch
      %350 = sbr.rel (0) target = $region37
    $region36: #{tpu_custom_call.1} parent=1 // pred_region
      %351 = dma.done [#allocation4], 16
    $region37: #{tpu_custom_call.1} parent=1 // pred_fallthru
      _
    %352 = vsyncpa [#allocation4], 1

</llo_original>
